<compile_context>
chip_gen: v5e
topology: v5e:2x2
jax: 0.10.0
libtpu: 0.0.40
codegen_flags: <defaults>
</compile_context>

<pallas_src>
import functools

import jax
import jax.numpy as jnp
from jax.experimental import pallas as pl
from jax.experimental.pallas import tpu as pltpu

EPS = 1e-5                # torch.nn.LayerNorm default
_LANE = 128               # TPU lane width
_TILE_ROWS_TARGET = 512   # rows per grid step (mem-bound sweet spot)
_MIN_GRID_STEPS = 4       # keep the pipeline + v7x 2-TC sharding alive


def _sublane_align(dtype):
    # Sub-32-bit dtypes pack along sublanes: 8 for 4-byte, 16 for 2-byte, 32 for 1-byte.
    itemsize = jnp.dtype(dtype).itemsize
    return {1: 32, 2: 16}.get(itemsize, 8)


@functools.lru_cache(maxsize=1)
def _vmem_budgets():
    """Generation-aware (block_budget_bytes, vmem_limit_bytes)."""
    cap = None
    try:
        cap = int(pltpu.get_tpu_info().vmem_capacity_bytes)
    except Exception:
        cap = None
    kind = ""
    try:
        kind = jax.devices()[0].device_kind.lower()
    except Exception:
        kind = ""
    if cap is None:
        cap = (128 * 1024 * 1024
               if any(v in kind for v in ("v4", "v5", "v6")) else 64 * 1024 * 1024)
    if "v7" in kind:
        cap = min(cap, 64 * 1024 * 1024)   # 64 MiB per TensorCore on v7x
    if cap >= 96 * 1024 * 1024:            # v4 / v5e / v6e: 128 MiB physical VMEM
        return 48 * 1024 * 1024, 96 * 1024 * 1024
    if cap >= 48 * 1024 * 1024:            # v7x: 64 MiB per TC, leave headroom
        return 20 * 1024 * 1024, 44 * 1024 * 1024
    return 8 * 1024 * 1024, 24 * 1024 * 1024   # unknown/older parts: conservative


def _pick_tile_rows(n_rows, n_cols, dtype, block_budget):
    align = _sublane_align(dtype)
    itemsize = jnp.dtype(dtype).itemsize
    # Per block-row VMEM: double-buffered input + output blocks in the native
    # dtype, plus ~3 tile-sized f32 temporaries (x_f32 / centered / y) that
    # Mosaic keeps live in VMEM for tiles far larger than the 64-vreg file.
    bytes_per_row = 4 * n_cols * itemsize + 3 * n_cols * 4
    cap = max(align, (block_budget // max(bytes_per_row, 1)) // align * align)
    tile = min(_TILE_ROWS_TARGET, cap)
    if n_rows < 2 * align:
        # Tiny input: one full-extent block (any row count legal, no masking).
        return n_rows
    # Keep >= _MIN_GRID_STEPS grid steps when rows allow it, so the BlockSpec
    # pipeline overlaps DMA with compute and v7x can shard the "parallel" row
    # axis across its 2 TensorCores (avoids the degenerate grid=(1,) case).
    steps_cap = max(align, (n_rows // _MIN_GRID_STEPS) // align * align)
    tile = min(tile, steps_cap)
    return max(align, (tile // align) * align)


def _layernorm_kernel(x_ref, g_ref, b_ref, o_ref, *, inv_f):
    # x_ref: (tile_rows, features); g_ref/b_ref: (1, features) f32, VMEM-resident.
    x = x_ref[...].astype(jnp.float32)
    mean = jnp.sum(x, axis=-1, keepdims=True) * inv_f
    centered = x - mean
    # Biased variance, like torch.nn.LayerNorm.
    var = jnp.sum(centered * centered, axis=-1, keepdims=True) * inv_f
    inv = jax.lax.rsqrt(var + EPS)
    y = centered * inv * g_ref[...] + b_ref[...]
    o_ref[...] = y.astype(o_ref.dtype)


def _layernorm_packed_kernel(x_ref, g_ref, b_ref, seg_ref, segt_ref, o_ref, *, inv_f):
    # x_ref: (tile_rows, 128) holding k = 128 // F logical rows per packed row.
    # seg_ref (128, k) / segt_ref (k, 128): one-hot segment matrices; the
    # per-segment reduce and broadcast-back run on the MXU (full slack in this
    # HBM-bound kernel) so every load/store stays at 128-lane width.
    hp = jax.lax.Precision.HIGHEST
    x = x_ref[...].astype(jnp.float32)
    seg = seg_ref[...]
    seg_t = segt_ref[...]
    sums = jnp.dot(x, seg, precision=hp, preferred_element_type=jnp.float32)
    mean = sums * inv_f                                        # (tile_rows, k)
    mean_b = jnp.dot(mean, seg_t, precision=hp, preferred_element_type=jnp.float32)
    centered = x - mean_b
    sumsq = jnp.dot(centered * centered, seg, precision=hp,
                    preferred_element_type=jnp.float32)
    inv = jax.lax.rsqrt(sumsq * inv_f + EPS)                   # (tile_rows, k)
    inv_b = jnp.dot(inv, seg_t, precision=hp, preferred_element_type=jnp.float32)
    y = centered * inv_b * g_ref[...] + b_ref[...]
    o_ref[...] = y.astype(o_ref.dtype)


@jax.jit
def layer_norm(x, gamma, beta):
    orig_shape = x.shape
    features = orig_shape[-1]
    x2d = x.reshape(-1, features)
    rows = x2d.shape[0]

    # Hoist params to f32 once; constant index_map keeps them resident in VMEM.
    g_f32 = gamma.reshape(-1).astype(jnp.float32)
    b_f32 = beta.reshape(-1).astype(jnp.float32)

    block_budget, vmem_limit = _vmem_budgets()
    compiler_params = pltpu.CompilerParams(
        dimension_semantics=("parallel",),   # row grid shards across v7x's 2 TCs
        vmem_limit_bytes=vmem_limit,
    )

    # Lane-dense repack for narrow features: fold k rows into one 128-lane row.
    pack = 1
    if features < _LANE and _LANE % features == 0:
        k = _LANE // features
        if rows % k == 0 and rows >= k:
            pack = k

    if pack > 1:
        k = pack
        p_cols = k * features                       # == 128 (lane-dense)
        p_rows = rows // k
        xp = x2d.reshape(p_rows, p_cols)
        g_p = jnp.tile(g_f32, k).reshape(1, p_cols)
        b_p = jnp.tile(b_f32, k).reshape(1, p_cols)
        seg = (jnp.arange(p_cols)[:, None] // features
               == jnp.arange(k)[None, :]).astype(jnp.float32)   # (128, k)
        seg_t = jnp.transpose(seg)                               # (k, 128)

        tile_rows = _pick_tile_rows(p_rows, p_cols, x.dtype, block_budget)
        grid = (pl.cdiv(p_rows, tile_rows),)   # ragged last block masked by Pallas
        kernel = functools.partial(_layernorm_packed_kernel,
                                   inv_f=float(1.0 / features))
        out = pl.pallas_call(
            kernel,
            out_shape=jax.ShapeDtypeStruct((p_rows, p_cols), x.dtype),
            grid_spec=pltpu.PrefetchScalarGridSpec(
                num_scalar_prefetch=0,
                grid=grid,
                in_specs=[
                    pl.BlockSpec((tile_rows, p_cols), lambda i: (i, 0)),
                    pl.BlockSpec((1, p_cols), lambda i: (0, 0)),
                    pl.BlockSpec((1, p_cols), lambda i: (0, 0)),
                    pl.BlockSpec((p_cols, k), lambda i: (0, 0)),
                    pl.BlockSpec((k, p_cols), lambda i: (0, 0)),
                ],
                out_specs=pl.BlockSpec((tile_rows, p_cols), lambda i: (i, 0)),
            ),
            compiler_params=compiler_params,
        )(xp, g_p, b_p, seg, seg_t)
        return out.reshape(orig_shape)

    # Plain path (features >= 128, or row count not divisible by the pack factor).
    g2d = g_f32.reshape(1, features)
    b2d = b_f32.reshape(1, features)
    tile_rows = _pick_tile_rows(rows, features, x.dtype, block_budget)
    grid = (pl.cdiv(rows, tile_rows),)       # ragged last block masked by Pallas
    kernel = functools.partial(_layernorm_kernel, inv_f=float(1.0 / features))
    out = pl.pallas_call(
        kernel,
        out_shape=jax.ShapeDtypeStruct((rows, features), x.dtype),
        grid_spec=pltpu.PrefetchScalarGridSpec(
            num_scalar_prefetch=0,
            grid=grid,
            in_specs=[
                pl.BlockSpec((tile_rows, features), lambda i: (i, 0)),
                pl.BlockSpec((1, features), lambda i: (0, 0)),
                pl.BlockSpec((1, features), lambda i: (0, 0)),
            ],
            out_specs=pl.BlockSpec((tile_rows, features), lambda i: (i, 0)),
        ),
        compiler_params=compiler_params,
    )(x2d, g2d, b2d)
    return out.reshape(orig_shape)


def _reference_layer_norm(x, gamma, beta):
    xf = x.astype(jnp.float32)
    mean = jnp.mean(xf, axis=-1, keepdims=True)
    var = jnp.mean((xf - mean) ** 2, axis=-1, keepdims=True)
    y = (xf - mean) * jax.lax.rsqrt(var + EPS)
    return (y * gamma.astype(jnp.float32) + beta.astype(jnp.float32)).astype(x.dtype)


if __name__ == "__main__":
    key = jax.random.PRNGKey(0)
    k1, k2, k3, k4, k5, k6 = jax.random.split(key, 6)

    # Case 1: narrow features (batch=2, seq=8, hidden=32), torch-default affine
    # (weight=ones, bias=zeros) -- exercises the lane-dense packed path.
    f_a = 32
    x_a = jax.random.normal(k1, (2, 8, f_a), dtype=jnp.float32)
    g_a = jnp.ones((f_a,), dtype=jnp.float32)
    b_a = jnp.zeros((f_a,), dtype=jnp.float32)
    out_a = jax.block_until_ready(layer_norm(x_a, g_a, b_a))
    ref_a = _reference_layer_norm(x_a, g_a, b_a)
    assert jnp.allclose(out_a, ref_a, atol=2e-5, rtol=2e-5), "mismatch (f32, F=32)"

    # Case 2: lane-dense features (hidden=128) with non-trivial gamma/beta (plain path).
    f_b = 128
    x_b = jax.random.normal(k2, (2, 8, f_b), dtype=jnp.float32)
    g_b = jax.random.normal(k3, (f_b,), dtype=jnp.float32)
    b_b = jax.random.normal(k4, (f_b,), dtype=jnp.float32)
    out_b = jax.block_until_ready(layer_norm(x_b, g_b, b_b))
    ref_b = _reference_layer_norm(x_b, g_b, b_b)
    assert jnp.allclose(out_b, ref_b, atol=2e-5, rtol=2e-5), "mismatch (f32, F=128)"

    # Case 3: packed path with a multi-step grid and a ragged (masked) last block.
    f_c = 32
    x_c = jax.random.normal(k5, (4, 20, f_c), dtype=jnp.float32)   # 80 rows -> 20 packed
    g_c = jax.random.normal(k6, (f_c,), dtype=jnp.float32) * 0.5 + 1.0
    b_c = jnp.linspace(-1.0, 1.0, f_c, dtype=jnp.float32)
    out_c = jax.block_until_ready(layer_norm(x_c, g_c, b_c))
    ref_c = _reference_layer_norm(x_c, g_c, b_c)
    assert jnp.allclose(out_c, ref_c, atol=2e-5, rtol=2e-5), "mismatch (f32, F=32 ragged)"

    # Case 4: bf16 input (dtype-aware tiling / 16-sublane alignment), plain path.
    f_d = 128
    x_d = jax.random.normal(k1, (2, 24, f_d), dtype=jnp.float32).astype(jnp.bfloat16)
    g_d = (jax.random.normal(k3, (f_d,), dtype=jnp.float32) * 0.1 + 1.0).astype(jnp.bfloat16)
    b_d = (jax.random.normal(k4, (f_d,), dtype=jnp.float32) * 0.1).astype(jnp.bfloat16)
    out_d = jax.block_until_ready(layer_norm(x_d, g_d, b_d))
    ref_d = _reference_layer_norm(x_d, g_d, b_d)
    assert jnp.allclose(out_d.astype(jnp.float32), ref_d.astype(jnp.float32),
                        atol=5e-2, rtol=2e-2), "mismatch (bf16, F=128)"

    print("KERNEL_OK")
</pallas_src>

<mosaic_0001>
module attributes {stable_mosaic.version = 11 : i64} {
  func.func @_layernorm_packed_kernel(%arg0: i32, %arg1: memref<4x128xf32, #tpu.memory_space<vmem>>, %arg2: memref<1x128xf32, #tpu.memory_space<vmem>>, %arg3: memref<1x128xf32, #tpu.memory_space<vmem>>, %arg4: memref<128x4xf32, #tpu.memory_space<vmem>>, %arg5: memref<4x128xf32, #tpu.memory_space<vmem>>, %arg6: memref<4x128xf32, #tpu.memory_space<vmem>>) attributes {dimension_semantics = [#tpu.dimension_semantics<parallel>], iteration_bounds = array<i64: 1>, scalar_prefetch = 0 : i64, scratch_operands = 0 : i64, tpu.core_type = #tpu.core_type<tc>, window_params = [{transform_indices = @transform_0, window_bounds = array<i64: 4, 128>}, {pipeline_mode = #tpu.pipeline_mode<synchronous>, transform_indices = @transform_1, window_bounds = array<i64: 1, 128>}, {pipeline_mode = #tpu.pipeline_mode<synchronous>, transform_indices = @transform_2, window_bounds = array<i64: 1, 128>}, {pipeline_mode = #tpu.pipeline_mode<synchronous>, transform_indices = @transform_3, window_bounds = array<i64: 128, 4>}, {pipeline_mode = #tpu.pipeline_mode<synchronous>, transform_indices = @transform_4, window_bounds = array<i64: 4, 128>}, {transform_indices = @transform_5, window_bounds = array<i64: 4, 128>}]} {
    %c0 = arith.constant 0 : index
    %c0_0 = arith.constant 0 : index
    %0 = vector.load %arg1[%c0, %c0_0] : memref<4x128xf32, #tpu.memory_space<vmem>>, vector<4x128xf32>
    %c0_1 = arith.constant 0 : index
    %c0_2 = arith.constant 0 : index
    %1 = vector.load %arg4[%c0_1, %c0_2] : memref<128x4xf32, #tpu.memory_space<vmem>>, vector<128x4xf32>
    %c0_3 = arith.constant 0 : index
    %c0_4 = arith.constant 0 : index
    %2 = vector.load %arg5[%c0_3, %c0_4] : memref<4x128xf32, #tpu.memory_space<vmem>>, vector<4x128xf32>
    %cst = arith.constant dense<0.000000e+00> : vector<4x4xf32>
    %3 = tpu.matmul %0, %1, %cst {dimension_numbers = #tpu.dot_dimension_numbers<[1], [0], [0], [1], [0, 0, 1, 1], [], []>, precision = #tpu.contract_precision<fp32>} : vector<4x128xf32>, vector<128x4xf32>, vector<4x4xf32> -> vector<4x4xf32>
    %cst_5 = arith.constant 3.125000e-02 : f32
    %4 = vector.broadcast %cst_5 : f32 to vector<4x4xf32>
    %5 = arith.mulf %3, %4 : vector<4x4xf32>
    %cst_6 = arith.constant dense<0.000000e+00> : vector<4x128xf32>
    %6 = tpu.matmul %5, %2, %cst_6 {dimension_numbers = #tpu.dot_dimension_numbers<[1], [0], [0], [1], [0, 0, 1, 1], [], []>, precision = #tpu.contract_precision<fp32>} : vector<4x4xf32>, vector<4x128xf32>, vector<4x128xf32> -> vector<4x128xf32>
    %7 = arith.subf %0, %6 : vector<4x128xf32>
    %8 = arith.mulf %7, %7 : vector<4x128xf32>
    %cst_7 = arith.constant dense<0.000000e+00> : vector<4x4xf32>
    %9 = tpu.matmul %8, %1, %cst_7 {dimension_numbers = #tpu.dot_dimension_numbers<[1], [0], [0], [1], [0, 0, 1, 1], [], []>, precision = #tpu.contract_precision<fp32>} : vector<4x128xf32>, vector<128x4xf32>, vector<4x4xf32> -> vector<4x4xf32>
    %cst_8 = arith.constant 3.125000e-02 : f32
    %10 = vector.broadcast %cst_8 : f32 to vector<4x4xf32>
    %11 = arith.mulf %9, %10 : vector<4x4xf32>
    %cst_9 = arith.constant 9.99999974E-6 : f32
    %12 = vector.broadcast %cst_9 : f32 to vector<4x4xf32>
    %13 = arith.addf %11, %12 : vector<4x4xf32>
    %14 = math.rsqrt %13 : vector<4x4xf32>
    %cst_10 = arith.constant dense<0.000000e+00> : vector<4x128xf32>
    %15 = tpu.matmul %14, %2, %cst_10 {dimension_numbers = #tpu.dot_dimension_numbers<[1], [0], [0], [1], [0, 0, 1, 1], [], []>, precision = #tpu.contract_precision<fp32>} : vector<4x4xf32>, vector<4x128xf32>, vector<4x128xf32> -> vector<4x128xf32>
    %16 = arith.mulf %7, %15 : vector<4x128xf32>
    %c0_11 = arith.constant 0 : index
    %c0_12 = arith.constant 0 : index
    %17 = vector.load %arg2[%c0_11, %c0_12] : memref<1x128xf32, #tpu.memory_space<vmem>>, vector<1x128xf32>
    %18 = vector.broadcast %17 : vector<1x128xf32> to vector<4x128xf32>
    %19 = arith.mulf %16, %18 : vector<4x128xf32>
    %c0_13 = arith.constant 0 : index
    %c0_14 = arith.constant 0 : index
    %20 = vector.load %arg3[%c0_13, %c0_14] : memref<1x128xf32, #tpu.memory_space<vmem>>, vector<1x128xf32>
    %21 = vector.broadcast %20 : vector<1x128xf32> to vector<4x128xf32>
    %22 = arith.addf %19, %21 : vector<4x128xf32>
    %c0_15 = arith.constant 0 : index
    %c0_16 = arith.constant 0 : index
    %23 = vector.load %arg6[%c0_15, %c0_16] : memref<4x128xf32, #tpu.memory_space<vmem>>, vector<4x128xf32>
    tpu.vector_store %arg6[%c0_15, %c0_16], %22 {strides = array<i32>} : memref<4x128xf32, #tpu.memory_space<vmem>>, vector<4x128xf32>,
    return
  }
  func.func @transform_0(%arg0: i32) -> (i32, i32) {
    %c0_i32 = arith.constant 0 : i32
    %c0_i32_0 = arith.constant 0 : i32
    return %arg0, %c0_i32 : i32, i32
  }
  func.func @transform_1(%arg0: i32) -> (i32, i32) {
    %c0_i32 = arith.constant 0 : i32
    %c0_i32_0 = arith.constant 0 : i32
    %c0_i32_1 = arith.constant 0 : i32
    return %c0_i32, %c0_i32_0 : i32, i32
  }
  func.func @transform_2(%arg0: i32) -> (i32, i32) {
    %c0_i32 = arith.constant 0 : i32
    %c0_i32_0 = arith.constant 0 : i32
    %c0_i32_1 = arith.constant 0 : i32
    return %c0_i32, %c0_i32_0 : i32, i32
  }
  func.func @transform_3(%arg0: i32) -> (i32, i32) {
    %c0_i32 = arith.constant 0 : i32
    %c0_i32_0 = arith.constant 0 : i32
    %c0_i32_1 = arith.constant 0 : i32
    return %c0_i32, %c0_i32_0 : i32, i32
  }
  func.func @transform_4(%arg0: i32) -> (i32, i32) {
    %c0_i32 = arith.constant 0 : i32
    %c0_i32_0 = arith.constant 0 : i32
    %c0_i32_1 = arith.constant 0 : i32
    return %c0_i32, %c0_i32_0 : i32, i32
  }
  func.func @transform_5(%arg0: i32) -> (i32, i32) {
    %c0_i32 = arith.constant 0 : i32
    %c0_i32_0 = arith.constant 0 : i32
    return %arg0, %c0_i32 : i32, i32
  }
}

</mosaic_0001>

<llo_original>
// kernel: tile.13
$region0: #{tile.13}
  #allocation0 [shape = 's32[1]{0}', space=sflag, size = 0x4, scoped, tag = 'scoped memory for tile.13']
  %s0 = inlined_call_operand.vmem [shape: f32[32], index: 0, kind: input, shape index: {}]
  %s1 = inlined_call_operand.vmem [shape: f32[4,32], index: 1, kind: output, shape index: {}]
  // Predicated region
  $region2: #{tile.13} parent=0 // pred_check
    _
  $region3: #{tile.13} parent=0 // pred_check_branch
    %3 = sbr.rel (0) target = $region5
  $region4: #{tile.13} parent=0 // pred_region
    _
  $region5: #{tile.13} parent=0 // pred_fallthru
    _
  %v4 = vld [vmem:[%s0] ss:$0 sm:$0xff]
  %5 = vst [vmem:[%s1] sm:$0xf] %v4

// kernel: tile.14
$region0: #{tile.14}
  %s0 = inlined_call_operand.vmem [shape: f32[4,32], index: 0, kind: input, shape index: {}]
  %s1 = inlined_call_operand.vmem [shape: f32[1,128], index: 1, kind: output, shape index: {}]
  $region1: #{tile.14} parent=0
    #allocation0 [shape = 'u8[4096]{0}', space=vmem, size = 0x1000, scoped, tag = 'scoped mem for output reshape']
    #allocation1 [shape = 'u8[4096]{0}', space=vmem, size = 0x1000, scoped, tag = 'scoped mem for input reshape']
    %s3 = ssub.s32 16, 1
    %v4 = vld [vmem:[%s0] sm:%s3]
    %5 = vst [vmem:[#allocation1] sm:%s3] %v4
    %v6 = vld [vmem:[#allocation1] sm:$0x1]
    %vm7 = vcmask 261120
    %8 = vst.msk [vmem:[#allocation0] sm:$0x1] %vm7, %v6
    %s9 = scalar_lea.vmem [#allocation1], 3
    %v10 = vld [vmem:[%s9] sm:$0x1]
    %11 = vrot.lane.b32.xlu0 %v10, 96
    %v12 = vpop.permute.xlu0 %11
    %vm13 = vcmask 1048320
    %14 = vst.msk [vmem:[#allocation0] sm:$0x1] %vm13, %v12
    %s15 = scalar_lea.vmem [#allocation1], 2
    %v16 = vld [vmem:[%s15] sm:$0x1]
    %17 = vrot.lane.b32.xlu0 %v16, 64
    %v18 = vpop.permute.xlu0 %17
    %vm19 = vcmask 785920
    %20 = vst.msk [vmem:[#allocation0] sm:$0x1] %vm19, %v18
    %s21 = scalar_lea.vmem [#allocation1], 1
    %v22 = vld [vmem:[%s21] sm:$0x1]
    %23 = vrot.lane.b32.xlu0 %v22, 32
    %v24 = vpop.permute.xlu0 %23
    %vm25 = vcmask 523520
    %26 = vst.msk [vmem:[#allocation0] sm:$0x1] %vm25, %v24
    %s28 = ssub.s32 2, 1
    %v29 = vld [vmem:[#allocation0] sm:%s28]
    %s31 = ssub.s32 2, 1
    %32 = vst [vmem:[%s1] sm:%s31] %v29

// kernel: layer_norm.1
$region0: #{layer_norm.1}
  #allocation0 [shape = 'u32[]', space=smem, size = 0x4, offset = 0x4, fixed_abs, tag = 'smem constant byte address 0x4 - core index']
  #allocation1 [shape = 'u32[72,128]{1,0:T(1,128)}', space=vmem, size = 0x9000, scoped, tag = 'internal scratch']
  %s0 = inlined_call_operand.vmem [shape: f32[4,128], index: 0, kind: input, shape index: {}]
  %s1 = inlined_call_operand.vmem [shape: f32[1,128], index: 1, kind: input, shape index: {}]
  %s2 = inlined_call_operand.vmem [shape: f32[1,128], index: 2, kind: input, shape index: {}]
  %s3 = inlined_call_operand.vmem [shape: f32[128,4], index: 3, kind: input, shape index: {}]
  %s4 = inlined_call_operand.vmem [shape: f32[4,128], index: 4, kind: input, shape index: {}]
  %s5 = inlined_call_operand.vmem [shape: f32[4,128], index: 5, kind: output, shape index: {}]
  %s6 = sld [smem:[#allocation0]]
  $region30: #{layer_norm.1} parent=0
    _
  %s8 = ssub.s32 1, %s6
  %s9 = scalar_select 0, %s8, %s6
  // Predicated region
  $region2: #{layer_norm.1} parent=0 // pred_check
    _
  $region3: #{layer_norm.1} parent=0 // pred_check_branch
    %11 = sbr.rel (0) target = $region5
  $region4: #{layer_norm.1} parent=0 // pred_region
    _
  $region5: #{layer_norm.1} parent=0 // pred_fallthru
    _
  // Predicated region
  $region6: #{layer_norm.1} parent=0 // pred_check
    _
  $region7: #{layer_norm.1} parent=0 // pred_check_branch
    %13 = sbr.rel (0) target = $region9
  $region8: #{layer_norm.1} parent=0 // pred_region
    _
  $region9: #{layer_norm.1} parent=0 // pred_fallthru
    _
  // Predicated region
  $region10: #{layer_norm.1} parent=0 // pred_check
    _
  $region11: #{layer_norm.1} parent=0 // pred_check_branch
    %15 = sbr.rel (0) target = $region13
  $region12: #{layer_norm.1} parent=0 // pred_region
    _
  $region13: #{layer_norm.1} parent=0 // pred_fallthru
    _
  // Predicated region
  $region14: #{layer_norm.1} parent=0 // pred_check
    _
  $region15: #{layer_norm.1} parent=0 // pred_check_branch
    %17 = sbr.rel (0) target = $region17
  $region16: #{layer_norm.1} parent=0 // pred_region
    _
  $region17: #{layer_norm.1} parent=0 // pred_fallthru
    _
  // Predicated region
  $region18: #{layer_norm.1} parent=0 // pred_check
    _
  $region19: #{layer_norm.1} parent=0 // pred_check_branch
    %19 = sbr.rel (0) target = $region21
  $region20: #{layer_norm.1} parent=0 // pred_region
    _
  $region21: #{layer_norm.1} parent=0 // pred_fallthru
    _
  %v20 = vld [vmem:[%s0] sm:$0xf]
  %v21 = vld [vmem:[%s3] sm:$0xff]
  %v22 = vld [vmem:[%s3 + $0x8] sm:$0xff]
  %v23 = vld [vmem:[%s3 + $0x10] sm:$0xff]
  %v24 = vld [vmem:[%s3 + $0x18] sm:$0xff]
  %v25 = vld [vmem:[%s3 + $0x20] sm:$0xff]
  %v26 = vld [vmem:[%s3 + $0x28] sm:$0xff]
  %v27 = vld [vmem:[%s3 + $0x30] sm:$0xff]
  %v28 = vld [vmem:[%s3 + $0x38] sm:$0xff]
  %v29 = vld [vmem:[%s3 + $0x40] sm:$0xff]
  %v30 = vld [vmem:[%s3 + $0x48] sm:$0xff]
  %v31 = vld [vmem:[%s3 + $0x50] sm:$0xff]
  %v32 = vld [vmem:[%s3 + $0x58] sm:$0xff]
  %v33 = vld [vmem:[%s3 + $0x60] sm:$0xff]
  %v34 = vld [vmem:[%s3 + $0x68] sm:$0xff]
  %v35 = vld [vmem:[%s3 + $0x70] sm:$0xff]
  %v36 = vld [vmem:[%s3 + $0x78] sm:$0xff]
  %v37 = vld [vmem:[%s4] sm:$0xf]
  %v38 = vand.u32 %v36, 4294901760
  %39 = vmatpush.msra.mxu0 %v38
  %v40 = vand.u32 %v35, 4294901760
  %41 = vmatpush.msra.mxu0 %v40
  %v42 = vand.u32 %v34, 4294901760
  %43 = vmatpush.msra.mxu0 %v42
  %v44 = vand.u32 %v33, 4294901760
  %45 = vmatpush.msra.mxu0 %v44
  %v46 = vand.u32 %v32, 4294901760
  %47 = vmatpush.msra.mxu0 %v46
  %v48 = vand.u32 %v31, 4294901760
  %49 = vmatpush.msra.mxu0 %v48
  %v50 = vand.u32 %v30, 4294901760
  %51 = vmatpush.msra.mxu0 %v50
  %v52 = vand.u32 %v29, 4294901760
  %53 = vmatpush.msra.mxu0 %v52
  %v54 = vand.u32 %v28, 4294901760
  %55 = vmatpush.msra.mxu0 %v54
  %v56 = vand.u32 %v27, 4294901760
  %57 = vmatpush.msra.mxu0 %v56
  %v58 = vand.u32 %v26, 4294901760
  %59 = vmatpush.msra.mxu0 %v58
  %v60 = vand.u32 %v25, 4294901760
  %61 = vmatpush.msra.mxu0 %v60
  %v62 = vand.u32 %v24, 4294901760
  %63 = vmatpush.msra.mxu0 %v62
  %v64 = vand.u32 %v23, 4294901760
  %65 = vmatpush.msra.mxu0 %v64
  %v66 = vand.u32 %v22, 4294901760
  %67 = vmatpush.msra.mxu0 %v66
  %v68 = vand.u32 %v21, 4294901760
  %69 = vmatpush.msra.mxu0 %v68
  %v70 = vand.u32 %v20, 4294901760
  %v71 = vsub.f32 %v20, %v70
  %v72 = vand.u32 %v71, 4294901760
  %v73 = vsub.f32 %v71, %v72
  %v74 = vand.u32 %v73, 4294901760
  %75 = vmatmul.f32.gmra.mxu0 %v74
  %v76 = vpop.f32.mrf.mxu0
  %v77 = vadd.f32 0.0, %v76
  %78 = vdwg.mxu0
  %v79 = vand.u32 %v36, 4294901760
  %v80 = vsub.f32 %v36, %v79
  %v81 = vand.u32 %v80, 4294901760
  %v82 = vsub.f32 %v80, %v81
  %v83 = vand.u32 %v82, 4294901760
  %84 = vmatpush.msra.mxu0 %v83
  %v85 = vand.u32 %v35, 4294901760
  %v86 = vsub.f32 %v35, %v85
  %v87 = vand.u32 %v86, 4294901760
  %v88 = vsub.f32 %v86, %v87
  %v89 = vand.u32 %v88, 4294901760
  %90 = vmatpush.msra.mxu0 %v89
  %v91 = vand.u32 %v34, 4294901760
  %v92 = vsub.f32 %v34, %v91
  %v93 = vand.u32 %v92, 4294901760
  %v94 = vsub.f32 %v92, %v93
  %v95 = vand.u32 %v94, 4294901760
  %96 = vmatpush.msra.mxu0 %v95
  %v97 = vand.u32 %v33, 4294901760
  %v98 = vsub.f32 %v33, %v97
  %v99 = vand.u32 %v98, 4294901760
  %v100 = vsub.f32 %v98, %v99
  %v101 = vand.u32 %v100, 4294901760
  %102 = vmatpush.msra.mxu0 %v101
  %v103 = vand.u32 %v32, 4294901760
  %v104 = vsub.f32 %v32, %v103
  %v105 = vand.u32 %v104, 4294901760
  %v106 = vsub.f32 %v104, %v105
  %v107 = vand.u32 %v106, 4294901760
  %108 = vmatpush.msra.mxu0 %v107
  %v109 = vand.u32 %v31, 4294901760
  %v110 = vsub.f32 %v31, %v109
  %v111 = vand.u32 %v110, 4294901760
  %v112 = vsub.f32 %v110, %v111
  %v113 = vand.u32 %v112, 4294901760
  %114 = vmatpush.msra.mxu0 %v113
  %v115 = vand.u32 %v30, 4294901760
  %v116 = vsub.f32 %v30, %v115
  %v117 = vand.u32 %v116, 4294901760
  %v118 = vsub.f32 %v116, %v117
  %v119 = vand.u32 %v118, 4294901760
  %120 = vmatpush.msra.mxu0 %v119
  %v121 = vand.u32 %v29, 4294901760
  %v122 = vsub.f32 %v29, %v121
  %v123 = vand.u32 %v122, 4294901760
  %v124 = vsub.f32 %v122, %v123
  %v125 = vand.u32 %v124, 4294901760
  %126 = vmatpush.msra.mxu0 %v125
  %v127 = vand.u32 %v28, 4294901760
  %v128 = vsub.f32 %v28, %v127
  %v129 = vand.u32 %v128, 4294901760
  %v130 = vsub.f32 %v128, %v129
  %v131 = vand.u32 %v130, 4294901760
  %132 = vmatpush.msra.mxu0 %v131
  %v133 = vand.u32 %v27, 4294901760
  %v134 = vsub.f32 %v27, %v133
  %v135 = vand.u32 %v134, 4294901760
  %v136 = vsub.f32 %v134, %v135
  %v137 = vand.u32 %v136, 4294901760
  %138 = vmatpush.msra.mxu0 %v137
  %v139 = vand.u32 %v26, 4294901760
  %v140 = vsub.f32 %v26, %v139
  %v141 = vand.u32 %v140, 4294901760
  %v142 = vsub.f32 %v140, %v141
  %v143 = vand.u32 %v142, 4294901760
  %144 = vmatpush.msra.mxu0 %v143
  %v145 = vand.u32 %v25, 4294901760
  %v146 = vsub.f32 %v25, %v145
  %v147 = vand.u32 %v146, 4294901760
  %v148 = vsub.f32 %v146, %v147
  %v149 = vand.u32 %v148, 4294901760
  %150 = vmatpush.msra.mxu0 %v149
  %v151 = vand.u32 %v24, 4294901760
  %v152 = vsub.f32 %v24, %v151
  %v153 = vand.u32 %v152, 4294901760
  %v154 = vsub.f32 %v152, %v153
  %v155 = vand.u32 %v154, 4294901760
  %156 = vmatpush.msra.mxu0 %v155
  %v157 = vand.u32 %v23, 4294901760
  %v158 = vsub.f32 %v23, %v157
  %v159 = vand.u32 %v158, 4294901760
  %v160 = vsub.f32 %v158, %v159
  %v161 = vand.u32 %v160, 4294901760
  %162 = vmatpush.msra.mxu0 %v161
  %v163 = vand.u32 %v22, 4294901760
  %v164 = vsub.f32 %v22, %v163
  %v165 = vand.u32 %v164, 4294901760
  %v166 = vsub.f32 %v164, %v165
  %v167 = vand.u32 %v166, 4294901760
  %168 = vmatpush.msra.mxu0 %v167
  %v169 = vand.u32 %v21, 4294901760
  %v170 = vsub.f32 %v21, %v169
  %v171 = vand.u32 %v170, 4294901760
  %v172 = vsub.f32 %v170, %v171
  %v173 = vand.u32 %v172, 4294901760
  %174 = vmatpush.msra.mxu0 %v173
  %v175 = vand.u32 %v20, 4294901760
  %176 = vmatmul.f32.gmra.mxu0 %v175
  %v177 = vpop.f32.mrf.mxu0
  %v178 = vadd.f32 %v77, %v177
  %179 = vdwg.mxu0
  %v180 = vand.u32 %v36, 4294901760
  %v181 = vsub.f32 %v36, %v180
  %182 = vmatpush.msra.mxu0 %v181
  %v183 = vand.u32 %v35, 4294901760
  %v184 = vsub.f32 %v35, %v183
  %185 = vmatpush.msra.mxu0 %v184
  %v186 = vand.u32 %v34, 4294901760
  %v187 = vsub.f32 %v34, %v186
  %188 = vmatpush.msra.mxu0 %v187
  %v189 = vand.u32 %v33, 4294901760
  %v190 = vsub.f32 %v33, %v189
  %191 = vmatpush.msra.mxu0 %v190
  %v192 = vand.u32 %v32, 4294901760
  %v193 = vsub.f32 %v32, %v192
  %194 = vmatpush.msra.mxu0 %v193
  %v195 = vand.u32 %v31, 4294901760
  %v196 = vsub.f32 %v31, %v195
  %197 = vmatpush.msra.mxu0 %v196
  %v198 = vand.u32 %v30, 4294901760
  %v199 = vsub.f32 %v30, %v198
  %200 = vmatpush.msra.mxu0 %v199
  %v201 = vand.u32 %v29, 4294901760
  %v202 = vsub.f32 %v29, %v201
  %203 = vmatpush.msra.mxu0 %v202
  %v204 = vand.u32 %v28, 4294901760
  %v205 = vsub.f32 %v28, %v204
  %206 = vmatpush.msra.mxu0 %v205
  %v207 = vand.u32 %v27, 4294901760
  %v208 = vsub.f32 %v27, %v207
  %209 = vmatpush.msra.mxu0 %v208
  %v210 = vand.u32 %v26, 4294901760
  %v211 = vsub.f32 %v26, %v210
  %212 = vmatpush.msra.mxu0 %v211
  %v213 = vand.u32 %v25, 4294901760
  %v214 = vsub.f32 %v25, %v213
  %215 = vmatpush.msra.mxu0 %v214
  %v216 = vand.u32 %v24, 4294901760
  %v217 = vsub.f32 %v24, %v216
  %218 = vmatpush.msra.mxu0 %v217
  %v219 = vand.u32 %v23, 4294901760
  %v220 = vsub.f32 %v23, %v219
  %221 = vmatpush.msra.mxu0 %v220
  %v222 = vand.u32 %v22, 4294901760
  %v223 = vsub.f32 %v22, %v222
  %224 = vmatpush.msra.mxu0 %v223
  %v225 = vand.u32 %v21, 4294901760
  %v226 = vsub.f32 %v21, %v225
  %227 = vmatpush.msra.mxu0 %v226
  %v228 = vand.u32 %v20, 4294901760
  %v229 = vsub.f32 %v20, %v228
  %230 = vmatmul.f32.gmra.mxu0 %v229
  %v231 = vpop.f32.mrf.mxu0
  %v232 = vadd.f32 %v178, %v231
  %233 = vdwg.mxu0
  %v234 = vand.u32 %v36, 4294901760
  %235 = vmatpush.msra.mxu0 %v234
  %v236 = vand.u32 %v35, 4294901760
  %237 = vmatpush.msra.mxu0 %v236
  %v238 = vand.u32 %v34, 4294901760
  %239 = vmatpush.msra.mxu0 %v238
  %v240 = vand.u32 %v33, 4294901760
  %241 = vmatpush.msra.mxu0 %v240
  %v242 = vand.u32 %v32, 4294901760
  %243 = vmatpush.msra.mxu0 %v242
  %v244 = vand.u32 %v31, 4294901760
  %245 = vmatpush.msra.mxu0 %v244
  %v246 = vand.u32 %v30, 4294901760
  %247 = vmatpush.msra.mxu0 %v246
  %v248 = vand.u32 %v29, 4294901760
  %249 = vmatpush.msra.mxu0 %v248
  %v250 = vand.u32 %v28, 4294901760
  %251 = vmatpush.msra.mxu0 %v250
  %v252 = vand.u32 %v27, 4294901760
  %253 = vmatpush.msra.mxu0 %v252
  %v254 = vand.u32 %v26, 4294901760
  %255 = vmatpush.msra.mxu0 %v254
  %v256 = vand.u32 %v25, 4294901760
  %257 = vmatpush.msra.mxu0 %v256
  %v258 = vand.u32 %v24, 4294901760
  %259 = vmatpush.msra.mxu0 %v258
  %v260 = vand.u32 %v23, 4294901760
  %261 = vmatpush.msra.mxu0 %v260
  %v262 = vand.u32 %v22, 4294901760
  %263 = vmatpush.msra.mxu0 %v262
  %v264 = vand.u32 %v21, 4294901760
  %265 = vmatpush.msra.mxu0 %v264
  %v266 = vand.u32 %v20, 4294901760
  %v267 = vsub.f32 %v20, %v266
  %v268 = vand.u32 %v267, 4294901760
  %269 = vmatmul.f32.gmra.mxu0 %v268
  %v270 = vpop.f32.mrf.mxu0
  %v271 = vadd.f32 %v232, %v270
  %272 = vdwg.mxu0
  %v273 = vand.u32 %v36, 4294901760
  %v274 = vsub.f32 %v36, %v273
  %v275 = vand.u32 %v274, 4294901760
  %276 = vmatpush.msra.mxu0 %v275
  %v277 = vand.u32 %v35, 4294901760
  %v278 = vsub.f32 %v35, %v277
  %v279 = vand.u32 %v278, 4294901760
  %280 = vmatpush.msra.mxu0 %v279
  %v281 = vand.u32 %v34, 4294901760
  %v282 = vsub.f32 %v34, %v281
  %v283 = vand.u32 %v282, 4294901760
  %284 = vmatpush.msra.mxu0 %v283
  %v285 = vand.u32 %v33, 4294901760
  %v286 = vsub.f32 %v33, %v285
  %v287 = vand.u32 %v286, 4294901760
  %288 = vmatpush.msra.mxu0 %v287
  %v289 = vand.u32 %v32, 4294901760
  %v290 = vsub.f32 %v32, %v289
  %v291 = vand.u32 %v290, 4294901760
  %292 = vmatpush.msra.mxu0 %v291
  %v293 = vand.u32 %v31, 4294901760
  %v294 = vsub.f32 %v31, %v293
  %v295 = vand.u32 %v294, 4294901760
  %296 = vmatpush.msra.mxu0 %v295
  %v297 = vand.u32 %v30, 4294901760
  %v298 = vsub.f32 %v30, %v297
  %v299 = vand.u32 %v298, 4294901760
  %300 = vmatpush.msra.mxu0 %v299
  %v301 = vand.u32 %v29, 4294901760
  %v302 = vsub.f32 %v29, %v301
  %v303 = vand.u32 %v302, 4294901760
  %304 = vmatpush.msra.mxu0 %v303
  %v305 = vand.u32 %v28, 4294901760
  %v306 = vsub.f32 %v28, %v305
  %v307 = vand.u32 %v306, 4294901760
  %308 = vmatpush.msra.mxu0 %v307
  %v309 = vand.u32 %v27, 4294901760
  %v310 = vsub.f32 %v27, %v309
  %v311 = vand.u32 %v310, 4294901760
  %312 = vmatpush.msra.mxu0 %v311
  %v313 = vand.u32 %v26, 4294901760
  %v314 = vsub.f32 %v26, %v313
  %v315 = vand.u32 %v314, 4294901760
  %316 = vmatpush.msra.mxu0 %v315
  %v317 = vand.u32 %v25, 4294901760
  %v318 = vsub.f32 %v25, %v317
  %v319 = vand.u32 %v318, 4294901760
  %320 = vmatpush.msra.mxu0 %v319
  %v321 = vand.u32 %v24, 4294901760
  %v322 = vsub.f32 %v24, %v321
  %v323 = vand.u32 %v322, 4294901760
  %324 = vmatpush.msra.mxu0 %v323
  %v325 = vand.u32 %v23, 4294901760
  %v326 = vsub.f32 %v23, %v325
  %v327 = vand.u32 %v326, 4294901760
  %328 = vmatpush.msra.mxu0 %v327
  %v329 = vand.u32 %v22, 4294901760
  %v330 = vsub.f32 %v22, %v329
  %v331 = vand.u32 %v330, 4294901760
  %332 = vmatpush.msra.mxu0 %v331
  %v333 = vand.u32 %v21, 4294901760
  %v334 = vsub.f32 %v21, %v333
  %v335 = vand.u32 %v334, 4294901760
  %336 = vmatpush.msra.mxu0 %v335
  %v337 = vand.u32 %v20, 4294901760
  %338 = vmatmul.f32.gmra.mxu0 %v337
  %v339 = vpop.f32.mrf.mxu0
  %v340 = vadd.f32 %v271, %v339
  %341 = vdwg.mxu0
  %v342 = vand.u32 %v36, 4294901760
  %343 = vmatpush.msra.mxu0 %v342
  %v344 = vand.u32 %v35, 4294901760
  %345 = vmatpush.msra.mxu0 %v344
  %v346 = vand.u32 %v34, 4294901760
  %347 = vmatpush.msra.mxu0 %v346
  %v348 = vand.u32 %v33, 4294901760
  %349 = vmatpush.msra.mxu0 %v348
  %v350 = vand.u32 %v32, 4294901760
  %351 = vmatpush.msra.mxu0 %v350
  %v352 = vand.u32 %v31, 4294901760
  %353 = vmatpush.msra.mxu0 %v352
  %v354 = vand.u32 %v30, 4294901760
  %355 = vmatpush.msra.mxu0 %v354
  %v356 = vand.u32 %v29, 4294901760
  %357 = vmatpush.msra.mxu0 %v356
  %v358 = vand.u32 %v28, 4294901760
  %359 = vmatpush.msra.mxu0 %v358
  %v360 = vand.u32 %v27, 4294901760
  %361 = vmatpush.msra.mxu0 %v360
  %v362 = vand.u32 %v26, 4294901760
  %363 = vmatpush.msra.mxu0 %v362
  %v364 = vand.u32 %v25, 4294901760
  %365 = vmatpush.msra.mxu0 %v364
  %v366 = vand.u32 %v24, 4294901760
  %367 = vmatpush.msra.mxu0 %v366
  %v368 = vand.u32 %v23, 4294901760
  %369 = vmatpush.msra.mxu0 %v368
  %v370 = vand.u32 %v22, 4294901760
  %371 = vmatpush.msra.mxu0 %v370
  %v372 = vand.u32 %v21, 4294901760
  %373 = vmatpush.msra.mxu0 %v372
  %v374 = vand.u32 %v20, 4294901760
  %375 = vmatmul.f32.gmra.mxu0 %v374
  %v376 = vpop.f32.mrf.mxu0
  %v377 = vadd.f32 %v340, %v376
  %378 = vdwg.mxu0
  %v379 = vmul.f32 %v377, 0.03125
  %vm380 = vcmask 31744
  %v382 = vsel %vm380, %v379, 0
  %vm384 = vcmask 1043456
  %v386 = vsel %vm384, %v37, 0
  %388 = vmatpush.msra.mxu0 0.0
  %389 = vmatpush.msra.mxu0 0.0
  %390 = vmatpush.msra.mxu0 0.0
  %391 = vmatpush.msra.mxu0 0.0
  %392 = vmatpush.msra.mxu0 0.0
  %393 = vmatpush.msra.mxu0 0.0
  %394 = vmatpush.msra.mxu0 0.0
  %395 = vmatpush.msra.mxu0 0.0
  %396 = vmatpush.msra.mxu0 0.0
  %397 = vmatpush.msra.mxu0 0.0
  %398 = vmatpush.msra.mxu0 0.0
  %399 = vmatpush.msra.mxu0 0.0
  %400 = vmatpush.msra.mxu0 0.0
  %401 = vmatpush.msra.mxu0 0.0
  %402 = vmatpush.msra.mxu0 0.0
  %v403 = vand.u32 %v386, 4294901760
  %404 = vmatpush.msra.mxu0 %v403
  %v405 = vand.u32 %v382, 4294901760
  %v406 = vsub.f32 %v382, %v405
  %v407 = vand.u32 %v406, 4294901760
  %v408 = vsub.f32 %v406, %v407
  %v409 = vand.u32 %v408, 4294901760
  %410 = vmatmul.f32.gmra.mxu0 %v409
  %v411 = vpop.f32.mrf.mxu0
  %v412 = vadd.f32 0.0, %v411
  %413 = vdwg.mxu0
  %414 = vmatpush.msra.mxu0 0.0
  %415 = vmatpush.msra.mxu0 0.0
  %416 = vmatpush.msra.mxu0 0.0
  %417 = vmatpush.msra.mxu0 0.0
  %418 = vmatpush.msra.mxu0 0.0
  %419 = vmatpush.msra.mxu0 0.0
  %420 = vmatpush.msra.mxu0 0.0
  %421 = vmatpush.msra.mxu0 0.0
  %422 = vmatpush.msra.mxu0 0.0
  %423 = vmatpush.msra.mxu0 0.0
  %424 = vmatpush.msra.mxu0 0.0
  %425 = vmatpush.msra.mxu0 0.0
  %426 = vmatpush.msra.mxu0 0.0
  %427 = vmatpush.msra.mxu0 0.0
  %428 = vmatpush.msra.mxu0 0.0
  %v429 = vand.u32 %v386, 4294901760
  %v430 = vsub.f32 %v386, %v429
  %v431 = vand.u32 %v430, 4294901760
  %v432 = vsub.f32 %v430, %v431
  %v433 = vand.u32 %v432, 4294901760
  %434 = vmatpush.msra.mxu0 %v433
  %v435 = vand.u32 %v382, 4294901760
  %436 = vmatmul.f32.gmra.mxu0 %v435
  %v437 = vpop.f32.mrf.mxu0
  %v438 = vadd.f32 %v412, %v437
  %439 = vdwg.mxu0
  %440 = vmatpush.msra.mxu0 0.0
  %441 = vmatpush.msra.mxu0 0.0
  %442 = vmatpush.msra.mxu0 0.0
  %443 = vmatpush.msra.mxu0 0.0
  %444 = vmatpush.msra.mxu0 0.0
  %445 = vmatpush.msra.mxu0 0.0
  %446 = vmatpush.msra.mxu0 0.0
  %447 = vmatpush.msra.mxu0 0.0
  %448 = vmatpush.msra.mxu0 0.0
  %449 = vmatpush.msra.mxu0 0.0
  %450 = vmatpush.msra.mxu0 0.0
  %451 = vmatpush.msra.mxu0 0.0
  %452 = vmatpush.msra.mxu0 0.0
  %453 = vmatpush.msra.mxu0 0.0
  %454 = vmatpush.msra.mxu0 0.0
  %v455 = vand.u32 %v386, 4294901760
  %v456 = vsub.f32 %v386, %v455
  %457 = vmatpush.msra.mxu0 %v456
  %v458 = vand.u32 %v382, 4294901760
  %v459 = vsub.f32 %v382, %v458
  %460 = vmatmul.f32.gmra.mxu0 %v459
  %v461 = vpop.f32.mrf.mxu0
  %v462 = vadd.f32 %v438, %v461
  %463 = vdwg.mxu0
  %464 = vmatpush.msra.mxu0 0.0
  %465 = vmatpush.msra.mxu0 0.0
  %466 = vmatpush.msra.mxu0 0.0
  %467 = vmatpush.msra.mxu0 0.0
  %468 = vmatpush.msra.mxu0 0.0
  %469 = vmatpush.msra.mxu0 0.0
  %470 = vmatpush.msra.mxu0 0.0
  %471 = vmatpush.msra.mxu0 0.0
  %472 = vmatpush.msra.mxu0 0.0
  %473 = vmatpush.msra.mxu0 0.0
  %474 = vmatpush.msra.mxu0 0.0
  %475 = vmatpush.msra.mxu0 0.0
  %476 = vmatpush.msra.mxu0 0.0
  %477 = vmatpush.msra.mxu0 0.0
  %478 = vmatpush.msra.mxu0 0.0
  %v479 = vand.u32 %v386, 4294901760
  %480 = vmatpush.msra.mxu0 %v479
  %v481 = vand.u32 %v382, 4294901760
  %v482 = vsub.f32 %v382, %v481
  %v483 = vand.u32 %v482, 4294901760
  %484 = vmatmul.f32.gmra.mxu0 %v483
  %v485 = vpop.f32.mrf.mxu0
  %v486 = vadd.f32 %v462, %v485
  %487 = vdwg.mxu0
  %488 = vmatpush.msra.mxu0 0.0
  %489 = vmatpush.msra.mxu0 0.0
  %490 = vmatpush.msra.mxu0 0.0
  %491 = vmatpush.msra.mxu0 0.0
  %492 = vmatpush.msra.mxu0 0.0
  %493 = vmatpush.msra.mxu0 0.0
  %494 = vmatpush.msra.mxu0 0.0
  %495 = vmatpush.msra.mxu0 0.0
  %496 = vmatpush.msra.mxu0 0.0
  %497 = vmatpush.msra.mxu0 0.0
  %498 = vmatpush.msra.mxu0 0.0
  %499 = vmatpush.msra.mxu0 0.0
  %500 = vmatpush.msra.mxu0 0.0
  %501 = vmatpush.msra.mxu0 0.0
  %502 = vmatpush.msra.mxu0 0.0
  %v503 = vand.u32 %v386, 4294901760
  %v504 = vsub.f32 %v386, %v503
  %v505 = vand.u32 %v504, 4294901760
  %506 = vmatpush.msra.mxu0 %v505
  %v507 = vand.u32 %v382, 4294901760
  %508 = vmatmul.f32.gmra.mxu0 %v507
  %v509 = vpop.f32.mrf.mxu0
  %v510 = vadd.f32 %v486, %v509
  %511 = vdwg.mxu0
  %512 = vmatpush.msra.mxu0 0.0
  %513 = vmatpush.msra.mxu0 0.0
  %514 = vmatpush.msra.mxu0 0.0
  %515 = vmatpush.msra.mxu0 0.0
  %516 = vmatpush.msra.mxu0 0.0
  %517 = vmatpush.msra.mxu0 0.0
  %518 = vmatpush.msra.mxu0 0.0
  %519 = vmatpush.msra.mxu0 0.0
  %520 = vmatpush.msra.mxu0 0.0
  %521 = vmatpush.msra.mxu0 0.0
  %522 = vmatpush.msra.mxu0 0.0
  %523 = vmatpush.msra.mxu0 0.0
  %524 = vmatpush.msra.mxu0 0.0
  %525 = vmatpush.msra.mxu0 0.0
  %526 = vmatpush.msra.mxu0 0.0
  %v527 = vand.u32 %v386, 4294901760
  %528 = vmatpush.msra.mxu0 %v527
  %v529 = vand.u32 %v382, 4294901760
  %530 = vmatmul.f32.gmra.mxu0 %v529
  %v531 = vpop.f32.mrf.mxu0
  %v532 = vadd.f32 %v510, %v531
  %533 = vdwg.mxu0
  %v534 = vsub.f32 %v20, %v532
  %v535 = vmul.f32 %v534, %v534
  %v536 = vand.u32 %v36, 4294901760
  %537 = vmatpush.msra.mxu0 %v536
  %v538 = vand.u32 %v35, 4294901760
  %539 = vmatpush.msra.mxu0 %v538
  %v540 = vand.u32 %v34, 4294901760
  %541 = vmatpush.msra.mxu0 %v540
  %v542 = vand.u32 %v33, 4294901760
  %543 = vmatpush.msra.mxu0 %v542
  %v544 = vand.u32 %v32, 4294901760
  %545 = vmatpush.msra.mxu0 %v544
  %v546 = vand.u32 %v31, 4294901760
  %547 = vmatpush.msra.mxu0 %v546
  %v548 = vand.u32 %v30, 4294901760
  %549 = vmatpush.msra.mxu0 %v548
  %v550 = vand.u32 %v29, 4294901760
  %551 = vmatpush.msra.mxu0 %v550
  %v552 = vand.u32 %v28, 4294901760
  %553 = vmatpush.msra.mxu0 %v552
  %v554 = vand.u32 %v27, 4294901760
  %555 = vmatpush.msra.mxu0 %v554
  %v556 = vand.u32 %v26, 4294901760
  %557 = vmatpush.msra.mxu0 %v556
  %v558 = vand.u32 %v25, 4294901760
  %559 = vmatpush.msra.mxu0 %v558
  %v560 = vand.u32 %v24, 4294901760
  %561 = vmatpush.msra.mxu0 %v560
  %v562 = vand.u32 %v23, 4294901760
  %563 = vmatpush.msra.mxu0 %v562
  %v564 = vand.u32 %v22, 4294901760
  %565 = vmatpush.msra.mxu0 %v564
  %v566 = vand.u32 %v21, 4294901760
  %567 = vmatpush.msra.mxu0 %v566
  %v568 = vand.u32 %v535, 4294901760
  %v569 = vsub.f32 %v535, %v568
  %v570 = vand.u32 %v569, 4294901760
  %v571 = vsub.f32 %v569, %v570
  %v572 = vand.u32 %v571, 4294901760
  %573 = vmatmul.f32.gmra.mxu0 %v572
  %v574 = vpop.f32.mrf.mxu0
  %v575 = vadd.f32 0.0, %v574
  %576 = vdwg.mxu0
  %v577 = vand.u32 %v36, 4294901760
  %v578 = vsub.f32 %v36, %v577
  %v579 = vand.u32 %v578, 4294901760
  %v580 = vsub.f32 %v578, %v579
  %v581 = vand.u32 %v580, 4294901760
  %582 = vmatpush.msra.mxu0 %v581
  %v583 = vand.u32 %v35, 4294901760
  %v584 = vsub.f32 %v35, %v583
  %v585 = vand.u32 %v584, 4294901760
  %v586 = vsub.f32 %v584, %v585
  %v587 = vand.u32 %v586, 4294901760
  %588 = vmatpush.msra.mxu0 %v587
  %v589 = vand.u32 %v34, 4294901760
  %v590 = vsub.f32 %v34, %v589
  %v591 = vand.u32 %v590, 4294901760
  %v592 = vsub.f32 %v590, %v591
  %v593 = vand.u32 %v592, 4294901760
  %594 = vmatpush.msra.mxu0 %v593
  %v595 = vand.u32 %v33, 4294901760
  %v596 = vsub.f32 %v33, %v595
  %v597 = vand.u32 %v596, 4294901760
  %v598 = vsub.f32 %v596, %v597
  %v599 = vand.u32 %v598, 4294901760
  %600 = vmatpush.msra.mxu0 %v599
  %v601 = vand.u32 %v32, 4294901760
  %v602 = vsub.f32 %v32, %v601
  %v603 = vand.u32 %v602, 4294901760
  %v604 = vsub.f32 %v602, %v603
  %v605 = vand.u32 %v604, 4294901760
  %606 = vmatpush.msra.mxu0 %v605
  %v607 = vand.u32 %v31, 4294901760
  %v608 = vsub.f32 %v31, %v607
  %v609 = vand.u32 %v608, 4294901760
  %v610 = vsub.f32 %v608, %v609
  %v611 = vand.u32 %v610, 4294901760
  %612 = vmatpush.msra.mxu0 %v611
  %v613 = vand.u32 %v30, 4294901760
  %v614 = vsub.f32 %v30, %v613
  %v615 = vand.u32 %v614, 4294901760
  %v616 = vsub.f32 %v614, %v615
  %v617 = vand.u32 %v616, 4294901760
  %618 = vmatpush.msra.mxu0 %v617
  %v619 = vand.u32 %v29, 4294901760
  %v620 = vsub.f32 %v29, %v619
  %v621 = vand.u32 %v620, 4294901760
  %v622 = vsub.f32 %v620, %v621
  %v623 = vand.u32 %v622, 4294901760
  %624 = vmatpush.msra.mxu0 %v623
  %v625 = vand.u32 %v28, 4294901760
  %v626 = vsub.f32 %v28, %v625
  %v627 = vand.u32 %v626, 4294901760
  %v628 = vsub.f32 %v626, %v627
  %v629 = vand.u32 %v628, 4294901760
  %630 = vmatpush.msra.mxu0 %v629
  %v631 = vand.u32 %v27, 4294901760
  %v632 = vsub.f32 %v27, %v631
  %v633 = vand.u32 %v632, 4294901760
  %v634 = vsub.f32 %v632, %v633
  %v635 = vand.u32 %v634, 4294901760
  %636 = vmatpush.msra.mxu0 %v635
  %v637 = vand.u32 %v26, 4294901760
  %v638 = vsub.f32 %v26, %v637
  %v639 = vand.u32 %v638, 4294901760
  %v640 = vsub.f32 %v638, %v639
  %v641 = vand.u32 %v640, 4294901760
  %642 = vmatpush.msra.mxu0 %v641
  %v643 = vand.u32 %v25, 4294901760
  %v644 = vsub.f32 %v25, %v643
  %v645 = vand.u32 %v644, 4294901760
  %v646 = vsub.f32 %v644, %v645
  %v647 = vand.u32 %v646, 4294901760
  %648 = vmatpush.msra.mxu0 %v647
  %v649 = vand.u32 %v24, 4294901760
  %v650 = vsub.f32 %v24, %v649
  %v651 = vand.u32 %v650, 4294901760
  %v652 = vsub.f32 %v650, %v651
  %v653 = vand.u32 %v652, 4294901760
  %654 = vmatpush.msra.mxu0 %v653
  %v655 = vand.u32 %v23, 4294901760
  %v656 = vsub.f32 %v23, %v655
  %v657 = vand.u32 %v656, 4294901760
  %v658 = vsub.f32 %v656, %v657
  %v659 = vand.u32 %v658, 4294901760
  %660 = vmatpush.msra.mxu0 %v659
  %v661 = vand.u32 %v22, 4294901760
  %v662 = vsub.f32 %v22, %v661
  %v663 = vand.u32 %v662, 4294901760
  %v664 = vsub.f32 %v662, %v663
  %v665 = vand.u32 %v664, 4294901760
  %666 = vmatpush.msra.mxu0 %v665
  %v667 = vand.u32 %v21, 4294901760
  %v668 = vsub.f32 %v21, %v667
  %v669 = vand.u32 %v668, 4294901760
  %v670 = vsub.f32 %v668, %v669
  %v671 = vand.u32 %v670, 4294901760
  %672 = vmatpush.msra.mxu0 %v671
  %v673 = vand.u32 %v535, 4294901760
  %674 = vmatmul.f32.gmra.mxu0 %v673
  %v675 = vpop.f32.mrf.mxu0
  %v676 = vadd.f32 %v575, %v675
  %677 = vdwg.mxu0
  %v678 = vand.u32 %v36, 4294901760
  %v679 = vsub.f32 %v36, %v678
  %680 = vmatpush.msra.mxu0 %v679
  %v681 = vand.u32 %v35, 4294901760
  %v682 = vsub.f32 %v35, %v681
  %683 = vmatpush.msra.mxu0 %v682
  %v684 = vand.u32 %v34, 4294901760
  %v685 = vsub.f32 %v34, %v684
  %686 = vmatpush.msra.mxu0 %v685
  %v687 = vand.u32 %v33, 4294901760
  %v688 = vsub.f32 %v33, %v687
  %689 = vmatpush.msra.mxu0 %v688
  %v690 = vand.u32 %v32, 4294901760
  %v691 = vsub.f32 %v32, %v690
  %692 = vmatpush.msra.mxu0 %v691
  %v693 = vand.u32 %v31, 4294901760
  %v694 = vsub.f32 %v31, %v693
  %695 = vmatpush.msra.mxu0 %v694
  %v696 = vand.u32 %v30, 4294901760
  %v697 = vsub.f32 %v30, %v696
  %698 = vmatpush.msra.mxu0 %v697
  %v699 = vand.u32 %v29, 4294901760
  %v700 = vsub.f32 %v29, %v699
  %701 = vmatpush.msra.mxu0 %v700
  %v702 = vand.u32 %v28, 4294901760
  %v703 = vsub.f32 %v28, %v702
  %704 = vmatpush.msra.mxu0 %v703
  %v705 = vand.u32 %v27, 4294901760
  %v706 = vsub.f32 %v27, %v705
  %707 = vmatpush.msra.mxu0 %v706
  %v708 = vand.u32 %v26, 4294901760
  %v709 = vsub.f32 %v26, %v708
  %710 = vmatpush.msra.mxu0 %v709
  %v711 = vand.u32 %v25, 4294901760
  %v712 = vsub.f32 %v25, %v711
  %713 = vmatpush.msra.mxu0 %v712
  %v714 = vand.u32 %v24, 4294901760
  %v715 = vsub.f32 %v24, %v714
  %716 = vmatpush.msra.mxu0 %v715
  %v717 = vand.u32 %v23, 4294901760
  %v718 = vsub.f32 %v23, %v717
  %719 = vmatpush.msra.mxu0 %v718
  %v720 = vand.u32 %v22, 4294901760
  %v721 = vsub.f32 %v22, %v720
  %722 = vmatpush.msra.mxu0 %v721
  %v723 = vand.u32 %v21, 4294901760
  %v724 = vsub.f32 %v21, %v723
  %725 = vmatpush.msra.mxu0 %v724
  %v726 = vand.u32 %v535, 4294901760
  %v727 = vsub.f32 %v535, %v726
  %728 = vmatmul.f32.gmra.mxu0 %v727
  %v729 = vpop.f32.mrf.mxu0
  %v730 = vadd.f32 %v676, %v729
  %731 = vdwg.mxu0
  %v732 = vand.u32 %v36, 4294901760
  %733 = vmatpush.msra.mxu0 %v732
  %v734 = vand.u32 %v35, 4294901760
  %735 = vmatpush.msra.mxu0 %v734
  %v736 = vand.u32 %v34, 4294901760
  %737 = vmatpush.msra.mxu0 %v736
  %v738 = vand.u32 %v33, 4294901760
  %739 = vmatpush.msra.mxu0 %v738
  %v740 = vand.u32 %v32, 4294901760
  %741 = vmatpush.msra.mxu0 %v740
  %v742 = vand.u32 %v31, 4294901760
  %743 = vmatpush.msra.mxu0 %v742
  %v744 = vand.u32 %v30, 4294901760
  %745 = vmatpush.msra.mxu0 %v744
  %v746 = vand.u32 %v29, 4294901760
  %747 = vmatpush.msra.mxu0 %v746
  %v748 = vand.u32 %v28, 4294901760
  %749 = vmatpush.msra.mxu0 %v748
  %v750 = vand.u32 %v27, 4294901760
  %751 = vmatpush.msra.mxu0 %v750
  %v752 = vand.u32 %v26, 4294901760
  %753 = vmatpush.msra.mxu0 %v752
  %v754 = vand.u32 %v25, 4294901760
  %755 = vmatpush.msra.mxu0 %v754
  %v756 = vand.u32 %v24, 4294901760
  %757 = vmatpush.msra.mxu0 %v756
  %v758 = vand.u32 %v23, 4294901760
  %759 = vmatpush.msra.mxu0 %v758
  %v760 = vand.u32 %v22, 4294901760
  %761 = vmatpush.msra.mxu0 %v760
  %v762 = vand.u32 %v21, 4294901760
  %763 = vmatpush.msra.mxu0 %v762
  %v764 = vand.u32 %v535, 4294901760
  %v765 = vsub.f32 %v535, %v764
  %v766 = vand.u32 %v765, 4294901760
  %767 = vmatmul.f32.gmra.mxu0 %v766
  %v768 = vpop.f32.mrf.mxu0
  %v769 = vadd.f32 %v730, %v768
  %770 = vdwg.mxu0
  %v771 = vand.u32 %v36, 4294901760
  %v772 = vsub.f32 %v36, %v771
  %v773 = vand.u32 %v772, 4294901760
  %774 = vmatpush.msra.mxu0 %v773
  %v775 = vand.u32 %v35, 4294901760
  %v776 = vsub.f32 %v35, %v775
  %v777 = vand.u32 %v776, 4294901760
  %778 = vmatpush.msra.mxu0 %v777
  %v779 = vand.u32 %v34, 4294901760
  %v780 = vsub.f32 %v34, %v779
  %v781 = vand.u32 %v780, 4294901760
  %782 = vmatpush.msra.mxu0 %v781
  %v783 = vand.u32 %v33, 4294901760
  %v784 = vsub.f32 %v33, %v783
  %v785 = vand.u32 %v784, 4294901760
  %786 = vmatpush.msra.mxu0 %v785
  %v787 = vand.u32 %v32, 4294901760
  %v788 = vsub.f32 %v32, %v787
  %v789 = vand.u32 %v788, 4294901760
  %790 = vmatpush.msra.mxu0 %v789
  %v791 = vand.u32 %v31, 4294901760
  %v792 = vsub.f32 %v31, %v791
  %v793 = vand.u32 %v792, 4294901760
  %794 = vmatpush.msra.mxu0 %v793
  %v795 = vand.u32 %v30, 4294901760
  %v796 = vsub.f32 %v30, %v795
  %v797 = vand.u32 %v796, 4294901760
  %798 = vmatpush.msra.mxu0 %v797
  %v799 = vand.u32 %v29, 4294901760
  %v800 = vsub.f32 %v29, %v799
  %v801 = vand.u32 %v800, 4294901760
  %802 = vmatpush.msra.mxu0 %v801
  %v803 = vand.u32 %v28, 4294901760
  %v804 = vsub.f32 %v28, %v803
  %v805 = vand.u32 %v804, 4294901760
  %806 = vmatpush.msra.mxu0 %v805
  %v807 = vand.u32 %v27, 4294901760
  %v808 = vsub.f32 %v27, %v807
  %v809 = vand.u32 %v808, 4294901760
  %810 = vmatpush.msra.mxu0 %v809
  %v811 = vand.u32 %v26, 4294901760
  %v812 = vsub.f32 %v26, %v811
  %v813 = vand.u32 %v812, 4294901760
  %814 = vmatpush.msra.mxu0 %v813
  %v815 = vand.u32 %v25, 4294901760
  %v816 = vsub.f32 %v25, %v815
  %v817 = vand.u32 %v816, 4294901760
  %818 = vmatpush.msra.mxu0 %v817
  %v819 = vand.u32 %v24, 4294901760
  %v820 = vsub.f32 %v24, %v819
  %v821 = vand.u32 %v820, 4294901760
  %822 = vmatpush.msra.mxu0 %v821
  %v823 = vand.u32 %v23, 4294901760
  %v824 = vsub.f32 %v23, %v823
  %v825 = vand.u32 %v824, 4294901760
  %826 = vmatpush.msra.mxu0 %v825
  %v827 = vand.u32 %v22, 4294901760
  %v828 = vsub.f32 %v22, %v827
  %v829 = vand.u32 %v828, 4294901760
  %830 = vmatpush.msra.mxu0 %v829
  %v831 = vand.u32 %v21, 4294901760
  %v832 = vsub.f32 %v21, %v831
  %v833 = vand.u32 %v832, 4294901760
  %834 = vmatpush.msra.mxu0 %v833
  %v835 = vand.u32 %v535, 4294901760
  %836 = vmatmul.f32.gmra.mxu0 %v835
  %v837 = vpop.f32.mrf.mxu0
  %v838 = vadd.f32 %v769, %v837
  %839 = vdwg.mxu0
  %v840 = vand.u32 %v36, 4294901760
  %841 = vmatpush.msra.mxu0 %v840
  %v842 = vand.u32 %v35, 4294901760
  %843 = vmatpush.msra.mxu0 %v842
  %v844 = vand.u32 %v34, 4294901760
  %845 = vmatpush.msra.mxu0 %v844
  %v846 = vand.u32 %v33, 4294901760
  %847 = vmatpush.msra.mxu0 %v846
  %v848 = vand.u32 %v32, 4294901760
  %849 = vmatpush.msra.mxu0 %v848
  %v850 = vand.u32 %v31, 4294901760
  %851 = vmatpush.msra.mxu0 %v850
  %v852 = vand.u32 %v30, 4294901760
  %853 = vmatpush.msra.mxu0 %v852
  %v854 = vand.u32 %v29, 4294901760
  %855 = vmatpush.msra.mxu0 %v854
  %v856 = vand.u32 %v28, 4294901760
  %857 = vmatpush.msra.mxu0 %v856
  %v858 = vand.u32 %v27, 4294901760
  %859 = vmatpush.msra.mxu0 %v858
  %v860 = vand.u32 %v26, 4294901760
  %861 = vmatpush.msra.mxu0 %v860
  %v862 = vand.u32 %v25, 4294901760
  %863 = vmatpush.msra.mxu0 %v862
  %v864 = vand.u32 %v24, 4294901760
  %865 = vmatpush.msra.mxu0 %v864
  %v866 = vand.u32 %v23, 4294901760
  %867 = vmatpush.msra.mxu0 %v866
  %v868 = vand.u32 %v22, 4294901760
  %869 = vmatpush.msra.mxu0 %v868
  %v870 = vand.u32 %v21, 4294901760
  %871 = vmatpush.msra.mxu0 %v870
  %v872 = vand.u32 %v535, 4294901760
  %873 = vmatmul.f32.gmra.mxu0 %v872
  %v874 = vpop.f32.mrf.mxu0
  %v875 = vadd.f32 %v838, %v874
  %876 = vdwg.mxu0
  %v877 = vmul.f32 %v875, 0.03125
  %v878 = vadd.f32 %v877, 1e-05
  %v879 = vrsqrt.pop %v878
  %v880 = vmul.f32 %v879, %v878
  %v881 = vmul.f32 %v880, %v879
  %v882 = vmul.f32 0.5, %v881
  %v883 = vsub.f32 1.5, %v882
  %v884 = vmul.f32 %v879, %v883
  %vm885 = vweird.f32 %v878
  %vm886 = vweird.f32 %v879
  %vm887 = vmor %vm885, %vm886
  %v888 = vsel %vm887, %v879, %v884
  %v890 = vsel %vm380, %v888, 0
  %892 = vmatpush.msra.mxu0 0.0
  %893 = vmatpush.msra.mxu0 0.0
  %894 = vmatpush.msra.mxu0 0.0
  %895 = vmatpush.msra.mxu0 0.0
  %896 = vmatpush.msra.mxu0 0.0
  %897 = vmatpush.msra.mxu0 0.0
  %898 = vmatpush.msra.mxu0 0.0
  %899 = vmatpush.msra.mxu0 0.0
  %900 = vmatpush.msra.mxu0 0.0
  %901 = vmatpush.msra.mxu0 0.0
  %902 = vmatpush.msra.mxu0 0.0
  %903 = vmatpush.msra.mxu0 0.0
  %904 = vmatpush.msra.mxu0 0.0
  %905 = vmatpush.msra.mxu0 0.0
  %906 = vmatpush.msra.mxu0 0.0
  %v907 = vand.u32 %v386, 4294901760
  %908 = vmatpush.msra.mxu0 %v907
  %v909 = vand.u32 %v890, 4294901760
  %v910 = vsub.f32 %v890, %v909
  %v911 = vand.u32 %v910, 4294901760
  %v912 = vsub.f32 %v910, %v911
  %v913 = vand.u32 %v912, 4294901760
  %914 = vmatmul.f32.gmra.mxu0 %v913
  %v915 = vpop.f32.mrf.mxu0
  %v916 = vadd.f32 0.0, %v915
  %917 = vdwg.mxu0
  %918 = vmatpush.msra.mxu0 0.0
  %919 = vmatpush.msra.mxu0 0.0
  %920 = vmatpush.msra.mxu0 0.0
  %921 = vmatpush.msra.mxu0 0.0
  %922 = vmatpush.msra.mxu0 0.0
  %923 = vmatpush.msra.mxu0 0.0
  %924 = vmatpush.msra.mxu0 0.0
  %925 = vmatpush.msra.mxu0 0.0
  %926 = vmatpush.msra.mxu0 0.0
  %927 = vmatpush.msra.mxu0 0.0
  %928 = vmatpush.msra.mxu0 0.0
  %929 = vmatpush.msra.mxu0 0.0
  %930 = vmatpush.msra.mxu0 0.0
  %931 = vmatpush.msra.mxu0 0.0
  %932 = vmatpush.msra.mxu0 0.0
  %v933 = vand.u32 %v386, 4294901760
  %v934 = vsub.f32 %v386, %v933
  %v935 = vand.u32 %v934, 4294901760
  %v936 = vsub.f32 %v934, %v935
  %v937 = vand.u32 %v936, 4294901760
  %938 = vmatpush.msra.mxu0 %v937
  %v939 = vand.u32 %v890, 4294901760
  %940 = vmatmul.f32.gmra.mxu0 %v939
  %v941 = vpop.f32.mrf.mxu0
  %v942 = vadd.f32 %v916, %v941
  %943 = vdwg.mxu0
  %944 = vmatpush.msra.mxu0 0.0
  %945 = vmatpush.msra.mxu0 0.0
  %946 = vmatpush.msra.mxu0 0.0
  %947 = vmatpush.msra.mxu0 0.0
  %948 = vmatpush.msra.mxu0 0.0
  %949 = vmatpush.msra.mxu0 0.0
  %950 = vmatpush.msra.mxu0 0.0
  %951 = vmatpush.msra.mxu0 0.0
  %952 = vmatpush.msra.mxu0 0.0
  %953 = vmatpush.msra.mxu0 0.0
  %954 = vmatpush.msra.mxu0 0.0
  %955 = vmatpush.msra.mxu0 0.0
  %956 = vmatpush.msra.mxu0 0.0
  %957 = vmatpush.msra.mxu0 0.0
  %958 = vmatpush.msra.mxu0 0.0
  %v959 = vand.u32 %v386, 4294901760
  %v960 = vsub.f32 %v386, %v959
  %961 = vmatpush.msra.mxu0 %v960
  %v962 = vand.u32 %v890, 4294901760
  %v963 = vsub.f32 %v890, %v962
  %964 = vmatmul.f32.gmra.mxu0 %v963
  %v965 = vpop.f32.mrf.mxu0
  %v966 = vadd.f32 %v942, %v965
  %967 = vdwg.mxu0
  %968 = vmatpush.msra.mxu0 0.0
  %969 = vmatpush.msra.mxu0 0.0
  %970 = vmatpush.msra.mxu0 0.0
  %971 = vmatpush.msra.mxu0 0.0
  %972 = vmatpush.msra.mxu0 0.0
  %973 = vmatpush.msra.mxu0 0.0
  %974 = vmatpush.msra.mxu0 0.0
  %975 = vmatpush.msra.mxu0 0.0
  %976 = vmatpush.msra.mxu0 0.0
  %977 = vmatpush.msra.mxu0 0.0
  %978 = vmatpush.msra.mxu0 0.0
  %979 = vmatpush.msra.mxu0 0.0
  %980 = vmatpush.msra.mxu0 0.0
  %981 = vmatpush.msra.mxu0 0.0
  %982 = vmatpush.msra.mxu0 0.0
  %v983 = vand.u32 %v386, 4294901760
  %984 = vmatpush.msra.mxu0 %v983
  %v985 = vand.u32 %v890, 4294901760
  %v986 = vsub.f32 %v890, %v985
  %v987 = vand.u32 %v986, 4294901760
  %988 = vmatmul.f32.gmra.mxu0 %v987
  %v989 = vpop.f32.mrf.mxu0
  %v990 = vadd.f32 %v966, %v989
  %991 = vdwg.mxu0
  %992 = vmatpush.msra.mxu0 0.0
  %993 = vmatpush.msra.mxu0 0.0
  %994 = vmatpush.msra.mxu0 0.0
  %995 = vmatpush.msra.mxu0 0.0
  %996 = vmatpush.msra.mxu0 0.0
  %997 = vmatpush.msra.mxu0 0.0
  %998 = vmatpush.msra.mxu0 0.0
  %999 = vmatpush.msra.mxu0 0.0
  %1000 = vmatpush.msra.mxu0 0.0
  %1001 = vmatpush.msra.mxu0 0.0
  %1002 = vmatpush.msra.mxu0 0.0
  %1003 = vmatpush.msra.mxu0 0.0
  %1004 = vmatpush.msra.mxu0 0.0
  %1005 = vmatpush.msra.mxu0 0.0
  %1006 = vmatpush.msra.mxu0 0.0
  %v1007 = vand.u32 %v386, 4294901760
  %v1008 = vsub.f32 %v386, %v1007
  %v1009 = vand.u32 %v1008, 4294901760
  %1010 = vmatpush.msra.mxu0 %v1009
  %v1011 = vand.u32 %v890, 4294901760
  %1012 = vmatmul.f32.gmra.mxu0 %v1011
  %v1013 = vpop.f32.mrf.mxu0
  %v1014 = vadd.f32 %v990, %v1013
  %1015 = vdwg.mxu0
  %1016 = vmatpush.msra.mxu0 0.0
  %1017 = vmatpush.msra.mxu0 0.0
  %1018 = vmatpush.msra.mxu0 0.0
  %1019 = vmatpush.msra.mxu0 0.0
  %1020 = vmatpush.msra.mxu0 0.0
  %1021 = vmatpush.msra.mxu0 0.0
  %1022 = vmatpush.msra.mxu0 0.0
  %1023 = vmatpush.msra.mxu0 0.0
  %1024 = vmatpush.msra.mxu0 0.0
  %1025 = vmatpush.msra.mxu0 0.0
  %1026 = vmatpush.msra.mxu0 0.0
  %1027 = vmatpush.msra.mxu0 0.0
  %1028 = vmatpush.msra.mxu0 0.0
  %1029 = vmatpush.msra.mxu0 0.0
  %1030 = vmatpush.msra.mxu0 0.0
  %v1031 = vand.u32 %v386, 4294901760
  %1032 = vmatpush.msra.mxu0 %v1031
  %v1033 = vand.u32 %v890, 4294901760
  %1034 = vmatmul.f32.gmra.mxu0 %v1033
  %v1035 = vpop.f32.mrf.mxu0
  %v1036 = vadd.f32 %v1014, %v1035
  %1037 = vdwg.mxu0
  %v1038 = vmul.f32 %v534, %v1036
  %v1039 = vld [vmem:[%s1] sm:$0x1]
  %v1041 = vperm.slane %v1039, 0
  %v1043 = vmul.f32 %v1038, %v1041
  %v1044 = vld [vmem:[%s2] sm:$0x1]
  %v1046 = vperm.slane %v1044, 0
  %v1048 = vadd.f32 %v1043, %v1046
  %1049 = vst [vmem:[%s5] sm:$0xf] %v1048
  // Predicated region
  $region22: #{layer_norm.1} parent=0 // pred_check
    _
  $region23: #{layer_norm.1} parent=0 // pred_check_branch
    %1051 = sbr.rel (0) target = $region25
  $region24: #{layer_norm.1} parent=0 // pred_region
    _
  $region25: #{layer_norm.1} parent=0 // pred_fallthru
    _
  // Predicated region
  $region26: #{layer_norm.1} parent=0 // pred_check
    _
  $region27: #{layer_norm.1} parent=0 // pred_check_branch
    %1053 = sbr.rel (0) target = $region29
  $region28: #{layer_norm.1} parent=0 // pred_region
    _
  $region29: #{layer_norm.1} parent=0 // pred_fallthru
    _

</llo_original>
